<compile_context>
chip_gen: v7x
topology: tpu7x:2x2x1
jax: 0.10.0
libtpu: 0.0.40
codegen_flags: <defaults>
</compile_context>

<pallas_src>
import functools

import jax
import jax.numpy as jnp
import numpy as np
from jax import lax
from jax.experimental import pallas as pl
from jax.experimental.pallas import tpu as pltpu


def _round_up(x, m):
    return ((x + m - 1) // m) * m


def _ensemble_kernel(feat_ref, w1t_ref, b1_ref, w2t_ref, b2_ref, preds_ref,
                     out_ref, *, negative_slope, n_components, pred_dim):
    # feat_ref : (TB, F)   natural batch-major block (bf16/f32, no transpose)
    # w1t_ref  : (H, F)    resident attention weights (feats dtype)
    # b1_ref   : (H, 1)    resident (f32)
    # w2t_ref  : (C, H)    resident (f32)
    # b2_ref   : (C, 1)    resident (f32)
    # preds_ref: (C*P, TB) batch-last predictions (storage dtype)
    # out_ref  : (P, TB)   batch-last output block (f32)

    # First matmul in "NT" form (contract F with F): hT = W1ᵀ-applied with the
    # batch on the lane axis — no HBM or on-chip transpose of the feats tile.
    hT = lax.dot_general(
        w1t_ref[...], feat_ref[...],
        dimension_numbers=(((1,), (1,)), ((), ())),
        preferred_element_type=jnp.float32)               # (H, TB) f32
    hT = hT + b1_ref[...]                                 # (H, 1) broadcast
    hT = jnp.where(hT > 0, hT, negative_slope * hT)       # LeakyReLU(0.2)

    # Second matmul is tiny (C x H); kept f32 for accuracy (cost negligible).
    logits = jnp.dot(w2t_ref[...], hT,
                     preferred_element_type=jnp.float32)  # (C, TB)
    logits = logits + b2_ref[...]                         # (C, 1) broadcast

    # Softmax over the component (sublane) axis — lane-dense, numerically stable.
    m = jnp.max(logits, axis=0, keepdims=True)            # (1, TB)
    e = jnp.exp(logits - m)
    denom = jnp.sum(e, axis=0, keepdims=True)
    weights = e * pl.reciprocal(denom, approx=True)       # (C, TB)

    # Weighted sum of component predictions.  preds stay in storage dtype and
    # are promoted per component so only one f32 copy is live at a time.
    preds = preds_ref[...]                                 # (C*P, TB)
    acc = weights[0:1, :] * preds[0:pred_dim, :]
    for c in range(1, n_components):                       # C is small & static
        acc = acc + weights[c:c + 1, :] * preds[c * pred_dim:(c + 1) * pred_dim, :]
    out_ref[...] = acc.astype(out_ref.dtype)


def _jnp_forward(feats_cat, preds_cpb, w1, b1, w2, b2, negative_slope=0.2):
    """Fused XLA fallback / reference (eval-mode forward)."""
    f = feats_cat.astype(jnp.float32)
    h = jnp.dot(f, w1.astype(jnp.float32),
                precision=lax.Precision.HIGHEST) + b1.astype(jnp.float32)[None, :]
    h = jnp.where(h > 0, h, negative_slope * h)
    logits = jnp.dot(h, w2.astype(jnp.float32),
                     precision=lax.Precision.HIGHEST) + b2.astype(jnp.float32)[None, :]
    weights = jax.nn.softmax(logits, axis=1)               # (B, C)
    return jnp.einsum("bc,cpb->bp", weights, preds_cpb.astype(jnp.float32))


def dynamic_weight_ensemble(feats_cat, preds_cpb, w1, b1, w2, b2,
                            negative_slope=0.2, block_b=32768,
                            min_pallas_batch=2048, force_pallas=False):
    """Eval-mode forward of DynamicWeightEnsemble.

    feats_cat: (B, F)     concatenated component features, natural batch-major
    preds_cpb: (C, P, B)  component predictions stacked batch-last by producer
    w1: (F, H), b1: (H,), w2: (H, C), b2: (C,)   attention-MLP parameters
    returns:   (B, P) float32
    """
    C, P, B = preds_cpb.shape
    F = feats_cat.shape[1]
    H = w1.shape[1]

    # Small batches: kernel launch + layout plumbing is pure overhead — let
    # XLA fuse it instead.
    if not force_pallas and B < min_pallas_batch:
        return _jnp_forward(feats_cat, preds_cpb, w1, b1, w2, b2, negative_slope)

    # Batch tile: lane-dense multiple of 128, large enough to amortize the
    # ~0.35 us fixed per-grid-step overhead (>=1-2 MB of streams per step),
    # capped so the grid keeps >= 4 steps (>= 2 per v7x TensorCore).
    tb = int(min(block_b, _round_up(pl.cdiv(B, 4), 128)))
    tb = max(128, _round_up(tb, 128))
    grid = (pl.cdiv(B, tb),)
    # No jnp.pad: boundary blocks are handled by Pallas (OOB reads are garbage
    # but stay column-local; OOB output lanes are masked on store).

    preds2d = preds_cpb.reshape(C * P, B)          # free view: collapse leading dims
    # Resident params (tiny).  W1ᵀ matches the feats dtype so the first matmul
    # is single-pass bf16 on the MXU when feats are bf16.
    w1t = jnp.swapaxes(w1, 0, 1).astype(feats_cat.dtype)   # (H, F)
    w2t = jnp.swapaxes(w2, 0, 1).astype(jnp.float32)       # (C, H)
    b1c = jnp.reshape(b1.astype(jnp.float32), (H, 1))
    b2c = jnp.reshape(b2.astype(jnp.float32), (C, 1))

    kernel = functools.partial(_ensemble_kernel,
                               negative_slope=negative_slope,
                               n_components=C, pred_dim=P)

    bytes_in = (feats_cat.size * feats_cat.dtype.itemsize
                + preds2d.size * preds2d.dtype.itemsize
                + w1t.size * w1t.dtype.itemsize + (w2t.size + H + C) * 4)
    cost = pl.CostEstimate(
        flops=int(2 * B * (F * H + H * C) + 2 * C * B * P),
        transcendentals=int(B * C),
        bytes_accessed=int(bytes_in + B * P * 4),
    )

    out_pb = pl.pallas_call(
        kernel,
        out_shape=jax.ShapeDtypeStruct((P, B), jnp.float32),
        grid_spec=pltpu.PrefetchScalarGridSpec(
            num_scalar_prefetch=0,
            grid=grid,
            in_specs=[
                pl.BlockSpec((tb, F), lambda i: (i, 0)),        # feats: streamed, natural layout
                pl.BlockSpec((H, F), lambda i: (0, 0)),         # w1ᵀ: resident
                pl.BlockSpec((H, 1), lambda i: (0, 0)),         # b1:  resident
                pl.BlockSpec((C, H), lambda i: (0, 0)),         # w2ᵀ: resident
                pl.BlockSpec((C, 1), lambda i: (0, 0)),         # b2:  resident
                pl.BlockSpec((C * P, tb), lambda i: (0, i)),    # preds: streamed, lane-dense
            ],
            out_specs=pl.BlockSpec((P, tb), lambda i: (0, i)),  # lane-dense output
        ),
        compiler_params=pltpu.CompilerParams(
            dimension_semantics=("parallel",),       # megacore shard on v7x
            vmem_limit_bytes=32 * 1024 * 1024,       # safe on v5e/v6e/v7x
        ),
        cost_estimate=cost,
    )(feats_cat, w1t, b1c, w2t, b2c, preds2d)

    # Consumers that can take batch-last (P, B) should use out_pb directly;
    # this swapaxes is the only remaining extra HBM round trip (the output is
    # the smallest stream) and is kept only to match the module's (B, P).
    return jnp.swapaxes(out_pb, 0, 1)                      # (B, P)


if __name__ == "__main__":
    # Small, module-consistent shapes; batch deliberately not a tile multiple
    # so the multi-step grid + masked boundary-block path is exercised.
    n_components = 2      # len(components)
    batch = 300
    feat_per_comp = 16
    total_feat_len = n_components * feat_per_comp          # F = 32
    hidden_len = 32                                        # H (256 in default cfg)
    pred_dim = 4                                           # P (e.g. num classes)

    key = jax.random.PRNGKey(0)
    k_feat, k_pred, k_w1, k_b1, k_w2, k_b2 = jax.random.split(key, 6)

    # Simulated component outputs (the HBM-bound streams, stored bf16).  The
    # producer stacks predictions batch-last (C, P, B) so the kernel consumes
    # them with zero wrapper-side copies.
    feats_cat = jax.random.normal(k_feat, (batch, total_feat_len),
                                  jnp.float32).astype(jnp.bfloat16)
    preds_cpb = jax.random.normal(k_pred, (n_components, pred_dim, batch),
                                  jnp.float32).astype(jnp.bfloat16)

    # Deterministic parameter init (PyTorch Linear-style uniform bounds).
    lim1 = 1.0 / np.sqrt(total_feat_len)
    lim2 = 1.0 / np.sqrt(hidden_len)
    w1 = jax.random.uniform(k_w1, (total_feat_len, hidden_len), jnp.float32,
                            -lim1, lim1)
    b1 = jax.random.uniform(k_b1, (hidden_len,), jnp.float32, -lim1, lim1)
    w2 = jax.random.uniform(k_w2, (hidden_len, n_components), jnp.float32,
                            -lim2, lim2)
    b2 = jax.random.uniform(k_b2, (n_components,), jnp.float32, -lim2, lim2)

    # batch=300 is below the auto-dispatch threshold, so force the Pallas path
    # for the test; the megacore tile cap gives tb=128 -> a 3-step grid with a
    # masked tail block (300 = 2*128 + 44).
    out = dynamic_weight_ensemble(feats_cat, preds_cpb, w1, b1, w2, b2,
                                  force_pallas=True)
    out = jax.block_until_ready(out)

    ref = _jnp_forward(feats_cat, preds_cpb, w1, b1, w2, b2)
    # Tolerance covers bf16 feature/pred streams + bf16 W1 MXU operand and the
    # approx EUP reciprocal in the softmax.
    np.testing.assert_allclose(np.asarray(out), np.asarray(ref),
                               rtol=5e-3, atol=5e-3)
    print("KERNEL_OK")
</pallas_src>

<mosaic_0001>
module attributes {stable_mosaic.version = 11 : i64} {
  func.func @_ensemble_kernel(%arg0: i32, %arg1: memref<128x32xbf16, #tpu.memory_space<vmem>>, %arg2: memref<32x32xbf16, #tpu.memory_space<vmem>>, %arg3: memref<32x1xf32, #tpu.memory_space<vmem>>, %arg4: memref<2x32xf32, #tpu.memory_space<vmem>>, %arg5: memref<2x1xf32, #tpu.memory_space<vmem>>, %arg6: memref<8x128xbf16, #tpu.memory_space<vmem>>, %arg7: memref<4x128xf32, #tpu.memory_space<vmem>>) attributes {dimension_semantics = [#tpu.dimension_semantics<parallel>], iteration_bounds = array<i64: 3>, scalar_prefetch = 0 : i64, scratch_operands = 0 : i64, tpu.core_type = #tpu.core_type<tc>, window_params = [{transform_indices = @transform_0, window_bounds = array<i64: 128, 32>}, {pipeline_mode = #tpu.pipeline_mode<synchronous>, transform_indices = @transform_1, window_bounds = array<i64: 32, 32>}, {pipeline_mode = #tpu.pipeline_mode<synchronous>, transform_indices = @transform_2, window_bounds = array<i64: 32, 1>}, {pipeline_mode = #tpu.pipeline_mode<synchronous>, transform_indices = @transform_3, window_bounds = array<i64: 2, 32>}, {pipeline_mode = #tpu.pipeline_mode<synchronous>, transform_indices = @transform_4, window_bounds = array<i64: 2, 1>}, {transform_indices = @transform_5, window_bounds = array<i64: 8, 128>}, {transform_indices = @transform_6, window_bounds = array<i64: 4, 128>}]} {
    %c0 = arith.constant 0 : index
    %c0_0 = arith.constant 0 : index
    %0 = vector.load %arg2[%c0, %c0_0] : memref<32x32xbf16, #tpu.memory_space<vmem>>, vector<32x32xbf16>
    %c0_1 = arith.constant 0 : index
    %c0_2 = arith.constant 0 : index
    %1 = vector.load %arg1[%c0_1, %c0_2] : memref<128x32xbf16, #tpu.memory_space<vmem>>, vector<128x32xbf16>
    %cst = arith.constant dense<0.000000e+00> : vector<32x128xf32>
    %2 = tpu.matmul %0, %1, %cst {dimension_numbers = #tpu.dot_dimension_numbers<[1], [1], [0], [0], [0, 0, 1, 0], [], []>} : vector<32x32xbf16>, vector<128x32xbf16>, vector<32x128xf32> -> vector<32x128xf32>
    %c0_3 = arith.constant 0 : index
    %c0_4 = arith.constant 0 : index
    %3 = vector.load %arg3[%c0_3, %c0_4] : memref<32x1xf32, #tpu.memory_space<vmem>>, vector<32x1xf32>
    %4 = vector.broadcast %3 : vector<32x1xf32> to vector<32x128xf32>
    %5 = arith.addf %2, %4 : vector<32x128xf32>
    %cst_5 = arith.constant 0.000000e+00 : f32
    %6 = vector.broadcast %cst_5 : f32 to vector<32x128xf32>
    %7 = arith.cmpf ogt, %5, %6 : vector<32x128xf32>
    %cst_6 = arith.constant 2.000000e-01 : f32
    %8 = vector.broadcast %cst_6 : f32 to vector<32x128xf32>
    %9 = arith.mulf %8, %5 : vector<32x128xf32>
    %10 = arith.select %7, %5, %9 : vector<32x128xi1>, vector<32x128xf32>
    %c0_7 = arith.constant 0 : index
    %c0_8 = arith.constant 0 : index
    %11 = vector.load %arg4[%c0_7, %c0_8] : memref<2x32xf32, #tpu.memory_space<vmem>>, vector<2x32xf32>
    %cst_9 = arith.constant dense<0.000000e+00> : vector<2x128xf32>
    %12 = tpu.matmul %11, %10, %cst_9 {dimension_numbers = #tpu.dot_dimension_numbers<[1], [0], [0], [1], [0, 0, 1, 1], [], []>} : vector<2x32xf32>, vector<32x128xf32>, vector<2x128xf32> -> vector<2x128xf32>
    %c0_10 = arith.constant 0 : index
    %c0_11 = arith.constant 0 : index
    %13 = vector.load %arg5[%c0_10, %c0_11] : memref<2x1xf32, #tpu.memory_space<vmem>>, vector<2x1xf32>
    %14 = vector.broadcast %13 : vector<2x1xf32> to vector<2x128xf32>
    %15 = arith.addf %12, %14 : vector<2x128xf32>
    %cst_12 = arith.constant dense<0xFF800000> : vector<128xf32>
    %16 = vector.multi_reduction <maximumf>, %15, %cst_12 [0] : vector<2x128xf32> to vector<128xf32>
    %17 = vector.shape_cast %16 : vector<128xf32> to vector<1x128xf32>
    %18 = vector.broadcast %17 : vector<1x128xf32> to vector<2x128xf32>
    %19 = arith.subf %15, %18 : vector<2x128xf32>
    %20 = math.exp %19 : vector<2x128xf32>
    %cst_13 = arith.constant dense<0.000000e+00> : vector<128xf32>
    %21 = vector.multi_reduction <add>, %20, %cst_13 [0] : vector<2x128xf32> to vector<128xf32>
    %22 = vector.shape_cast %21 : vector<128xf32> to vector<1x128xf32>
    %23 = tpu.reciprocal %22 {approx = true} : vector<1x128xf32> -> vector<1x128xf32>
    %24 = vector.broadcast %23 : vector<1x128xf32> to vector<2x128xf32>
    %25 = arith.mulf %20, %24 : vector<2x128xf32>
    %c0_14 = arith.constant 0 : index
    %c0_15 = arith.constant 0 : index
    %26 = vector.load %arg6[%c0_14, %c0_15] : memref<8x128xbf16, #tpu.memory_space<vmem>>, vector<8x128xbf16>
    %27 = vector.extract_strided_slice %25 {offsets = [0, 0], sizes = [1, 128], strides = [1, 1]} : vector<2x128xf32> to vector<1x128xf32>
    %28 = vector.extract_strided_slice %26 {offsets = [0, 0], sizes = [4, 128], strides = [1, 1]} : vector<8x128xbf16> to vector<4x128xbf16>
    %29 = arith.extf %28 : vector<4x128xbf16> to vector<4x128xf32>
    %30 = vector.broadcast %27 : vector<1x128xf32> to vector<4x128xf32>
    %31 = arith.mulf %30, %29 : vector<4x128xf32>
    %32 = vector.extract_strided_slice %25 {offsets = [1, 0], sizes = [1, 128], strides = [1, 1]} : vector<2x128xf32> to vector<1x128xf32>
    %33 = vector.extract_strided_slice %26 {offsets = [4, 0], sizes = [4, 128], strides = [1, 1]} : vector<8x128xbf16> to vector<4x128xbf16>
    %34 = arith.extf %33 : vector<4x128xbf16> to vector<4x128xf32>
    %35 = vector.broadcast %32 : vector<1x128xf32> to vector<4x128xf32>
    %36 = arith.mulf %35, %34 : vector<4x128xf32>
    %37 = arith.addf %31, %36 : vector<4x128xf32>
    %c0_16 = arith.constant 0 : index
    %c0_17 = arith.constant 0 : index
    %38 = vector.load %arg7[%c0_16, %c0_17] : memref<4x128xf32, #tpu.memory_space<vmem>>, vector<4x128xf32>
    tpu.vector_store %arg7[%c0_16, %c0_17], %37 {strides = array<i32>} : memref<4x128xf32, #tpu.memory_space<vmem>>, vector<4x128xf32>,
    return
  }
  func.func @transform_0(%arg0: i32) -> (i32, i32) {
    %c0_i32 = arith.constant 0 : i32
    %c0_i32_0 = arith.constant 0 : i32
    return %arg0, %c0_i32 : i32, i32
  }
  func.func @transform_1(%arg0: i32) -> (i32, i32) {
    %c0_i32 = arith.constant 0 : i32
    %c0_i32_0 = arith.constant 0 : i32
    %c0_i32_1 = arith.constant 0 : i32
    return %c0_i32, %c0_i32_0 : i32, i32
  }
  func.func @transform_2(%arg0: i32) -> (i32, i32) {
    %c0_i32 = arith.constant 0 : i32
    %c0_i32_0 = arith.constant 0 : i32
    %c0_i32_1 = arith.constant 0 : i32
    return %c0_i32, %c0_i32_0 : i32, i32
  }
  func.func @transform_3(%arg0: i32) -> (i32, i32) {
    %c0_i32 = arith.constant 0 : i32
    %c0_i32_0 = arith.constant 0 : i32
    %c0_i32_1 = arith.constant 0 : i32
    return %c0_i32, %c0_i32_0 : i32, i32
  }
  func.func @transform_4(%arg0: i32) -> (i32, i32) {
    %c0_i32 = arith.constant 0 : i32
    %c0_i32_0 = arith.constant 0 : i32
    %c0_i32_1 = arith.constant 0 : i32
    return %c0_i32, %c0_i32_0 : i32, i32
  }
  func.func @transform_5(%arg0: i32) -> (i32, i32) {
    %c0_i32 = arith.constant 0 : i32
    %c0_i32_0 = arith.constant 0 : i32
    return %c0_i32, %arg0 : i32, i32
  }
  func.func @transform_6(%arg0: i32) -> (i32, i32) {
    %c0_i32 = arith.constant 0 : i32
    %c0_i32_0 = arith.constant 0 : i32
    return %c0_i32, %arg0 : i32, i32
  }
}

</mosaic_0001>

<llo_original>
// kernel: tpu_custom_call.1
$region0: #{tpu_custom_call.1}
  #allocation0 [shape = 'u32[]', space=smem, size = 0x4, offset = 0x4, fixed_abs, tag = 'smem constant byte address 0x4 - core index']
  #allocation1 [shape = 'u32[144,128]{1,0:T(1,128)}', space=vmem, size = 0x12000, scoped, tag = 'internal scratch']
  %s0 = inlined_call_operand.vmem [shape: bf16[300,32], index: 0, kind: input, shape index: {}]
  %s1 = inlined_call_operand.vmem [shape: bf16[32,32], index: 1, kind: input, shape index: {}]
  %s2 = inlined_call_operand.vmem [shape: f32[32,1], index: 2, kind: input, shape index: {}]
  %s3 = inlined_call_operand.vmem [shape: f32[2,32], index: 3, kind: input, shape index: {}]
  %s4 = inlined_call_operand.vmem [shape: f32[2,1], index: 4, kind: input, shape index: {}]
  %s5 = inlined_call_operand.vmem [shape: bf16[8,300], index: 5, kind: input, shape index: {}]
  %s6 = inlined_call_operand.hbm [shape: f32[4,300], index: 6, kind: output, shape index: {}]
  %s7 = sld [smem:[#allocation0]]
  $region57: #{tpu_custom_call.1} parent=0
    _
  %s9 = ssub.s32 1, %s7
  %s10 = scalar_select 0, %s9, %s7
  $region1: #{tpu_custom_call.1} parent=0
    #allocation2 [shape = 'u8[4096]{0}', space=vmem, size = 0x1000, scoped, tag = 'output window, operand 0']
    #allocation3 [shape = 's32[2]{0}', space=sflag, size = 0x8, scoped, tag = 'scoped memory for tpu_custom_call.1']
    %11 = vsyncpa [#allocation3], 0
    %s12 = scalar_lea.sflag [#allocation3], 1
    %13 = vsyncpa %s12, 0
    loop: start=0, step=1, limit=5
    $region2: #{tpu_custom_call.1} parent=1 // loop_pre_header
      _
    $region3: #{tpu_custom_call.1} parent=1 // loop_header
      %s15 = sphi 0, %s19
      %p16 = scmp.ge.s32.totalorder %s15, 5
      %s25 = sphi 0, %s27
      %s28 = sphi 0, %s25
      %s29 = sphi 0, %s28
      %s45 = sphi 0, %s29
      %s49 = sphi 0, %s49
      %s51 = sphi 0, %s49
      %s52 = sphi 0, %s51
      %s66 = sphi 0, %s52
      %s70 = sphi 0, %s70
      %s72 = sphi 0, %s70
      %s73 = sphi 0, %s72
      %s87 = sphi 0, %s73
      %s91 = sphi 0, %s91
      %s93 = sphi 0, %s91
      %s94 = sphi 0, %s93
      %s108 = sphi 0, %s94
      %s112 = sphi 0, %s112
      %s114 = sphi 0, %s112
      %s115 = sphi 0, %s114
      %s129 = sphi 0, %s115
      %s135 = sphi 0, %s137
      %s138 = sphi 0, %s135
      %s139 = sphi 0, %s138
      %s155 = sphi 0, %s139
      %s161 = sphi 0, %s163
      %s164 = sphi 0, %s161
      %s165 = sphi 0, %s164
      %s181 = sphi 0, %s165
    $region4: #{tpu_custom_call.1} parent=1 // loop_header_branch
      %18 = sbr.rel (%p16) target = $region8
    $region5: #{tpu_custom_call.1} parent=1 // loop_body
      %s20 = ssub.s32 %s15, 1
      %s21 = ssub.s32 %s15, 2
      %s22 = sadd.s32 %s15, 1
      %s23 = ssub.s32 %s15, %s22
      %p24 = scmp.eq.s32.totalorder %s23, 0
      %s26 = sadd.s32 %s25, 1
      %s27 = scalar_select %p24, %s25, %s26
      %p30 = pneg %p24
      %p31 = scmp.eq.s32.totalorder %s15, 2
      %p32 = por %p30, %p31
      %p33 = scmp.ne.s32.totalorder %s25, %s28
      %p34 = scmp.eq.s32.totalorder %s15, 0
      %p35 = por %p33, %p34
      %p36 = scmp.ne.s32.totalorder %s25, %s28
      %p37 = scmp.eq.s32.totalorder %s20, 2
      %p38 = por %p36, %p37
      %p39 = scmp.ne.s32.totalorder %s28, %s29
      %p40 = scmp.eq.s32.totalorder %s20, 0
      %p41 = por %p39, %p40
      %p42 = scmp.ne.s32.totalorder %s28, %s29
      %p43 = scmp.eq.s32.totalorder %s21, 2
      %p44 = por %p42, %p43
      %p46 = scmp.ne.s32.totalorder %s29, %s45
      %p47 = scmp.eq.s32.totalorder %s21, 0
      %p48 = por %p46, %p47
      %s50 = sadd.s32 %s49, 1
      %p53 = scmp.eq.s32.totalorder %s15, 2
      %p54 = scmp.ne.s32.totalorder %s49, %s51
      %p55 = scmp.eq.s32.totalorder %s15, 0
      %p56 = por %p54, %p55
      %p57 = scmp.ne.s32.totalorder %s49, %s51
      %p58 = scmp.eq.s32.totalorder %s20, 2
      %p59 = por %p57, %p58
      %p60 = scmp.ne.s32.totalorder %s51, %s52
      %p61 = scmp.eq.s32.totalorder %s20, 0
      %p62 = por %p60, %p61
      %p63 = scmp.ne.s32.totalorder %s51, %s52
      %p64 = scmp.eq.s32.totalorder %s21, 2
      %p65 = por %p63, %p64
      %p67 = scmp.ne.s32.totalorder %s52, %s66
      %p68 = scmp.eq.s32.totalorder %s21, 0
      %p69 = por %p67, %p68
      %s71 = sadd.s32 %s70, 1
      %p74 = scmp.eq.s32.totalorder %s15, 2
      %p75 = scmp.ne.s32.totalorder %s70, %s72
      %p76 = scmp.eq.s32.totalorder %s15, 0
      %p77 = por %p75, %p76
      %p78 = scmp.ne.s32.totalorder %s70, %s72
      %p79 = scmp.eq.s32.totalorder %s20, 2
      %p80 = por %p78, %p79
      %p81 = scmp.ne.s32.totalorder %s72, %s73
      %p82 = scmp.eq.s32.totalorder %s20, 0
      %p83 = por %p81, %p82
      %p84 = scmp.ne.s32.totalorder %s72, %s73
      %p85 = scmp.eq.s32.totalorder %s21, 2
      %p86 = por %p84, %p85
      %p88 = scmp.ne.s32.totalorder %s73, %s87
      %p89 = scmp.eq.s32.totalorder %s21, 0
      %p90 = por %p88, %p89
      %s92 = sadd.s32 %s91, 1
      %p95 = scmp.eq.s32.totalorder %s15, 2
      %p96 = scmp.ne.s32.totalorder %s91, %s93
      %p97 = scmp.eq.s32.totalorder %s15, 0
      %p98 = por %p96, %p97
      %p99 = scmp.ne.s32.totalorder %s91, %s93
      %p100 = scmp.eq.s32.totalorder %s20, 2
      %p101 = por %p99, %p100
      %p102 = scmp.ne.s32.totalorder %s93, %s94
      %p103 = scmp.eq.s32.totalorder %s20, 0
      %p104 = por %p102, %p103
      %p105 = scmp.ne.s32.totalorder %s93, %s94
      %p106 = scmp.eq.s32.totalorder %s21, 2
      %p107 = por %p105, %p106
      %p109 = scmp.ne.s32.totalorder %s94, %s108
      %p110 = scmp.eq.s32.totalorder %s21, 0
      %p111 = por %p109, %p110
      %s113 = sadd.s32 %s112, 1
      %p116 = scmp.eq.s32.totalorder %s15, 2
      %p117 = scmp.ne.s32.totalorder %s112, %s114
      %p118 = scmp.eq.s32.totalorder %s15, 0
      %p119 = por %p117, %p118
      %p120 = scmp.ne.s32.totalorder %s112, %s114
      %p121 = scmp.eq.s32.totalorder %s20, 2
      %p122 = por %p120, %p121
      %p123 = scmp.ne.s32.totalorder %s114, %s115
      %p124 = scmp.eq.s32.totalorder %s20, 0
      %p125 = por %p123, %p124
      %p126 = scmp.ne.s32.totalorder %s114, %s115
      %p127 = scmp.eq.s32.totalorder %s21, 2
      %p128 = por %p126, %p127
      %p130 = scmp.ne.s32.totalorder %s115, %s129
      %p131 = scmp.eq.s32.totalorder %s21, 0
      %p132 = por %p130, %p131
      %s133 = ssub.s32 %s15, %s22
      %p134 = scmp.eq.s32.totalorder %s133, 0
      %s136 = sadd.s32 %s135, 1
      %s137 = scalar_select %p134, %s135, %s136
      %p140 = pneg %p134
      %p141 = scmp.eq.s32.totalorder %s15, 2
      %p142 = por %p140, %p141
      %p143 = scmp.ne.s32.totalorder %s135, %s138
      %p144 = scmp.eq.s32.totalorder %s15, 0
      %p145 = por %p143, %p144
      %p146 = scmp.ne.s32.totalorder %s135, %s138
      %p147 = scmp.eq.s32.totalorder %s20, 2
      %p148 = por %p146, %p147
      %p149 = scmp.ne.s32.totalorder %s138, %s139
      %p150 = scmp.eq.s32.totalorder %s20, 0
      %p151 = por %p149, %p150
      %p152 = scmp.ne.s32.totalorder %s138, %s139
      %p153 = scmp.eq.s32.totalorder %s21, 2
      %p154 = por %p152, %p153
      %p156 = scmp.ne.s32.totalorder %s139, %s155
      %p157 = scmp.eq.s32.totalorder %s21, 0
      %p158 = por %p156, %p157
      %s159 = ssub.s32 %s15, %s22
      %p160 = scmp.eq.s32.totalorder %s159, 0
      %s162 = sadd.s32 %s161, 1
      %s163 = scalar_select %p160, %s161, %s162
      %p166 = pneg %p160
      %p167 = scmp.eq.s32.totalorder %s15, 2
      %p168 = por %p166, %p167
      %p169 = scmp.ne.s32.totalorder %s161, %s164
      %p170 = scmp.eq.s32.totalorder %s15, 0
      %p171 = por %p169, %p170
      %p172 = scmp.ne.s32.totalorder %s161, %s164
      %p173 = scmp.eq.s32.totalorder %s20, 2
      %p174 = por %p172, %p173
      %p175 = scmp.ne.s32.totalorder %s164, %s165
      %p176 = scmp.eq.s32.totalorder %s20, 0
      %p177 = por %p175, %p176
      %p178 = scmp.ne.s32.totalorder %s164, %s165
      %p179 = scmp.eq.s32.totalorder %s21, 2
      %p180 = por %p178, %p179
      %p182 = scmp.ne.s32.totalorder %s165, %s181
      %p183 = scmp.eq.s32.totalorder %s21, 0
      %p184 = por %p182, %p183
      %p185 = scmp.le.s32.totalorder 1, %s15
      %p186 = scmp.lt.s32.totalorder %s15, 4
      %p187 = pnand %p185, %p186
      %p188 = pneg %p187
      // Predicated region
      $region9: #{tpu_custom_call.1} parent=5 // pred_check
        _
      $region10: #{tpu_custom_call.1} parent=5 // pred_check_branch
        %190 = sbr.rel (%p187) target = $region12
      $region11: #{tpu_custom_call.1} parent=5 // pred_region
        %s191 = ssub.s32 %s15, 1
        // Predicated region
        $region13: #{tpu_custom_call.1} parent=11 // pred_check
          %p192 = pneg %p62
        $region14: #{tpu_custom_call.1} parent=11 // pred_check_branch
          %194 = sbr.rel (%p192) target = $region16
        $region15: #{tpu_custom_call.1} parent=11 // pred_region
          _
        $region16: #{tpu_custom_call.1} parent=11 // pred_fallthru
          _
        // Predicated region
        $region17: #{tpu_custom_call.1} parent=11 // pred_check
          %p195 = pneg %p83
        $region18: #{tpu_custom_call.1} parent=11 // pred_check_branch
          %197 = sbr.rel (%p195) target = $region20
        $region19: #{tpu_custom_call.1} parent=11 // pred_region
          _
        $region20: #{tpu_custom_call.1} parent=11 // pred_fallthru
          _
        // Predicated region
        $region21: #{tpu_custom_call.1} parent=11 // pred_check
          %p198 = pneg %p104
        $region22: #{tpu_custom_call.1} parent=11 // pred_check_branch
          %200 = sbr.rel (%p198) target = $region24
        $region23: #{tpu_custom_call.1} parent=11 // pred_region
          _
        $region24: #{tpu_custom_call.1} parent=11 // pred_fallthru
          _
        // Predicated region
        $region25: #{tpu_custom_call.1} parent=11 // pred_check
          %p201 = pneg %p125
        $region26: #{tpu_custom_call.1} parent=11 // pred_check_branch
          %203 = sbr.rel (%p201) target = $region28
        $region27: #{tpu_custom_call.1} parent=11 // pred_region
          _
        $region28: #{tpu_custom_call.1} parent=11 // pred_fallthru
          _
      $region12: #{tpu_custom_call.1} parent=5 // pred_fallthru
        _
      %p204 = scmp.lt.s32.totalorder %s15, 3
      // Predicated region
      $region29: #{tpu_custom_call.1} parent=5 // pred_check
        %p205 = pneg %p204
      $region30: #{tpu_custom_call.1} parent=5 // pred_check_branch
        %207 = sbr.rel (%p205) target = $region32
      $region31: #{tpu_custom_call.1} parent=5 // pred_region
        // Predicated region
        $region33: #{tpu_custom_call.1} parent=31 // pred_check
          %p208 = pneg %p35
        $region34: #{tpu_custom_call.1} parent=31 // pred_check_branch
          %210 = sbr.rel (%p208) target = $region36
        $region35: #{tpu_custom_call.1} parent=31 // pred_region
          %s211 = smul.u32 16, %s15
          %s212 = ssub.s32 38, %s211
          %p213 = scmp.lt.s32.totalorder %s212, 16
          %s214 = scalar_select %p213, %s212, 16
          %s215 = smul.u32 64, %s214
          %p216 = scmp.lt.s32.totalorder %s211, 37
          %s217 = scalar_select %p216, %s211, 37
          %s218 = smul.addr %s217, 4
          %s219 = scalar_lea.vmem %s0, %s218
          %s220 = smul.u32 16, %s15
          %s221 = ssub.s32 38, %s220
          %p222 = scmp.lt.s32.totalorder %s221, 16
          %s223 = scalar_select %p222, %s221, 16
          %s224 = smul.u32 64, %s223
        $region36: #{tpu_custom_call.1} parent=31 // pred_fallthru
          _
        // Predicated region
        $region37: #{tpu_custom_call.1} parent=31 // pred_check
          %p225 = pneg %p145
        $region38: #{tpu_custom_call.1} parent=31 // pred_check_branch
          %227 = sbr.rel (%p225) target = $region40
        $region39: #{tpu_custom_call.1} parent=31 // pred_region
          %p228 = scmp.lt.s32.totalorder %s15, 2
          %s229 = scalar_select %p228, %s15, 2
          %s230 = smul.addr %s229, 4
          %s231 = scalar_lea.vmem %s5, %s230
        $region40: #{tpu_custom_call.1} parent=31 // pred_fallthru
          _
      $region32: #{tpu_custom_call.1} parent=5 // pred_fallthru
        _
      %p232 = scmp.le.s32.totalorder 1, %s15
      %p233 = scmp.lt.s32.totalorder %s15, 4
      %p234 = pnand %p232, %p233
      %p235 = pneg %p234
      // Predicated region
      $region41: #{tpu_custom_call.1} parent=5 // pred_check
        _
      $region42: #{tpu_custom_call.1} parent=5 // pred_check_branch
        %237 = sbr.rel (%p234) target = $region44
      $region43: #{tpu_custom_call.1} parent=5 // pred_region
        %s238 = ssub.s32 %s15, 1
        %s239 = smul.u32 16, %s20
        %s240 = ssub.s32 38, %s239
        %p241 = scmp.lt.s32.totalorder %s240, 16
        %s242 = scalar_select %p241, %s240, 16
        %s243 = smul.u32 64, %s242
        %p244 = scmp.lt.s32.totalorder %s239, 37
        %s245 = scalar_select %p244, %s239, 37
        %s246 = smul.addr %s245, 4
        %s247 = scalar_lea.vmem %s0, %s246
        %p248 = pneg %p41
        %p249 = pneg %p38
        %p250 = pneg %p62
        %p251 = pneg %p59
        %p252 = pneg %p83
        %p253 = pneg %p80
        %p254 = pneg %p104
        %p255 = pneg %p101
        %p256 = pneg %p125
        %p257 = pneg %p122
        %p258 = scmp.lt.s32.totalorder %s20, 2
        %s259 = scalar_select %p258, %s20, 2
        %s260 = smul.addr %s259, 4
        %s261 = scalar_lea.vmem %s5, %s260
        %p262 = pneg %p151
        %p263 = pneg %p148
        %p264 = pneg %p177
        %p265 = pneg %p174
        %s266 = sand.u32 %s164, 1
        %s267 = scalar_lea.sflag [#allocation3], %s266
        %s268 = sand.u32 %s164, 1
        %s269 = smul.addr %s268, 4
        %s270 = scalar_lea.vmem [#allocation2], %s269
        %s271 = smul.u32 16, %s20
        %s272 = ssub.s32 38, %s271
        %p273 = scmp.lt.s32.totalorder %s272, 16
        %s274 = scalar_select %p273, %s272, 16
        %s275 = smul.u32 64, %s274
        %p276 = scmp.lt.s32.totalorder %s271, 37
        %s277 = scalar_select %p276, %s271, 37
        %s278 = smul.addr %s277, 4
        %s279 = scalar_lea.vmem %s0, %s278
        %s280 = smul.u32 16, %s20
        %s281 = ssub.s32 38, %s280
        %p282 = scmp.lt.s32.totalorder %s281, 16
        %s283 = scalar_select %p282, %s281, 16
        %s284 = smul.u32 64, %s283
        %p285 = scmp.lt.s32.totalorder %s20, 2
        %s286 = scalar_select %p285, %s20, 2
        %s287 = smul.addr %s286, 4
        %s288 = scalar_lea.vmem %s5, %s287
        %v290 = vld [vmem:[%s1] sm:$0xf]
        %v291 = vld [vmem:[%s1 + $0x4] sm:$0xf]
        %v292 = vld [vmem:[%s1 + $0x8] sm:$0xf]
        %v293 = vld [vmem:[%s1 + $0xc] sm:$0xf]
        %v294 = vld [vmem:[%s279] sm:$0xf]
        %v295 = vld [vmem:[%s279 + $0x4] sm:$0xf]
        %v296 = vld [vmem:[%s279 + $0x8] sm:$0xf]
        %v297 = vld [vmem:[%s279 + $0xc] sm:$0xf]
        %v298 = vld [vmem:[%s279 + $0x10] sm:$0xf]
        %v299 = vld [vmem:[%s279 + $0x14] sm:$0xf]
        %v300 = vld [vmem:[%s279 + $0x18] sm:$0xf]
        %v301 = vld [vmem:[%s279 + $0x1c] sm:$0xf]
        %v302 = vld [vmem:[%s279 + $0x20] sm:$0xf]
        %v303 = vld [vmem:[%s279 + $0x24] sm:$0xf]
        %v304 = vld [vmem:[%s279 + $0x28] sm:$0xf]
        %v305 = vld [vmem:[%s279 + $0x2c] sm:$0xf]
        %v306 = vld [vmem:[%s279 + $0x30] sm:$0xf]
        %v307 = vld [vmem:[%s279 + $0x34] sm:$0xf]
        %v308 = vld [vmem:[%s279 + $0x38] sm:$0xf]
        %v309 = vld [vmem:[%s279 + $0x3c] sm:$0xf]
        %v310 = vld [vmem:[%s2] sm:$0xff]
        %v311 = vld [vmem:[%s2 + $0x8] sm:$0xff]
        %v312 = vld [vmem:[%s2 + $0x10] sm:$0xff]
        %v313 = vld [vmem:[%s2 + $0x18] sm:$0xff]
        %315 = vset.pattern.permute.xlu0 0
        %316 = vperm.xlu0 %315, %v310
        %v317 = vpop.permute.xlu0 %316
        %320 = vset.pattern.permute.xlu0 0
        %321 = vperm.xlu0 %320, %v311
        %v322 = vpop.permute.xlu0 %321
        %325 = vset.pattern.permute.xlu0 0
        %326 = vperm.xlu0 %325, %v312
        %v327 = vpop.permute.xlu0 %326
        %330 = vset.pattern.permute.xlu0 0
        %331 = vperm.xlu0 %330, %v313
        %v332 = vpop.permute.xlu0 %331
        %v338 = vunpack.c.l.b16 %v290
        %v339 = vunpack.c.l.b16 %v291
        %v340 = vunpack.c.l.b16 %v292
        %v341 = vunpack.c.l.b16 %v293
        %v342 = vpack.c.b16 %v339, %v338
        %v343 = vpack.c.b16 %v341, %v340
        %v360 = vunpack.c.l.b16 %v294
        %v361 = vunpack.c.l.b16 %v295
        %v362 = vunpack.c.l.b16 %v296
        %v363 = vunpack.c.l.b16 %v297
        %v364 = vunpack.c.l.b16 %v298
        %v365 = vunpack.c.l.b16 %v299
        %v366 = vunpack.c.l.b16 %v300
        %v367 = vunpack.c.l.b16 %v301
        %v368 = vunpack.c.l.b16 %v302
        %v369 = vunpack.c.l.b16 %v303
        %v370 = vunpack.c.l.b16 %v304
        %v371 = vunpack.c.l.b16 %v305
        %v372 = vunpack.c.l.b16 %v306
        %v373 = vunpack.c.l.b16 %v307
        %v374 = vunpack.c.l.b16 %v308
        %v375 = vunpack.c.l.b16 %v309
        %v376 = vpack.c.b16 %v361, %v360
        %v377 = vpack.c.b16 %v363, %v362
        %v378 = vpack.c.b16 %v365, %v364
        %v379 = vpack.c.b16 %v367, %v366
        %v380 = vpack.c.b16 %v369, %v368
        %v381 = vpack.c.b16 %v371, %v370
        %v382 = vpack.c.b16 %v373, %v372
        %v383 = vpack.c.b16 %v375, %v374
        %vm384 = vcmask 261120
        %v386 = vsel %vm384, %v342, 0
        %v389 = vsel %vm384, %v343, 0
        %v392 = vsel %vm384, %v376, 0
        %v395 = vsel %vm384, %v377, 0
        %v398 = vsel %vm384, %v378, 0
        %v401 = vsel %vm384, %v379, 0
        %v404 = vsel %vm384, %v380, 0
        %v407 = vsel %vm384, %v381, 0
        %v410 = vsel %vm384, %v382, 0
        %v413 = vsel %vm384, %v383, 0
        %415 = vmatprep.subr.bf16.mxu0 0
        %416 = vmatpush1.bf16.xpose.msra.mxu0 %v392
        %417 = vmatprep.subr.bf16.mxu0 0
        %418 = vmatpush1.bf16.xpose.msra.mxu0 %v395
        %419 = vmatprep.subr.bf16.mxu0 0
        %420 = vmatpush1.bf16.xpose.msra.mxu0 %v398
        %421 = vmatprep.subr.bf16.mxu0 0
        %422 = vmatpush1.bf16.xpose.msra.mxu0 %v401
        %423 = vmatprep.subr.bf16.mxu0 0
        %424 = vmatpush1.bf16.xpose.msra.mxu0 %v404
        %425 = vmatprep.subr.bf16.mxu0 0
        %426 = vmatpush1.bf16.xpose.msra.mxu0 %v407
        %427 = vmatprep.subr.bf16.mxu0 0
        %428 = vmatpush1.bf16.xpose.msra.mxu0 %v410
        %429 = vmatprep.subr.bf16.mxu0 0
        %430 = vmatpush1.bf16.xpose.msra.mxu0 %v413
        %431 = vmatprep.subr.bf16.mxu0 0
        %432 = vmatpush1.bf16.xpose.msra.mxu0 0
        %433 = vmatprep.subr.bf16.mxu0 0
        %434 = vmatpush1.bf16.xpose.msra.mxu0 0
        %435 = vmatprep.subr.bf16.mxu0 0
        %436 = vmatpush1.bf16.xpose.msra.mxu0 0
        %437 = vmatprep.subr.bf16.mxu0 0
        %438 = vmatpush1.bf16.xpose.msra.mxu0 0
        %439 = vmatprep.subr.bf16.mxu0 0
        %440 = vmatpush1.bf16.xpose.msra.mxu0 0
        %441 = vmatprep.subr.bf16.mxu0 0
        %442 = vmatpush1.bf16.xpose.msra.mxu0 0
        %443 = vmatprep.subr.bf16.mxu0 0
        %444 = vmatpush1.bf16.xpose.msra.mxu0 0
        %445 = vmatprep.subr.bf16.mxu0 0
        %446 = vmatpush1.bf16.xpose.msra.mxu0 0
        %447 = vmatprep.mubr.bf16.mxu0 0
        %448 = vmatmul.mubr.bf16.gmra.mrb[0].mxu0 %v386
        %v449 = vpop.f32.mrb[0].mxu0
        %v450 = vadd.f32 %v317, %v449
        %v451 = vpop.f32.mrb[0].mxu0
        %v452 = vpop.f32.mrb[0].mxu0
        %v453 = vadd.f32 %v322, %v452
        %v454 = vpop.f32.mrb[0].mxu0
        %455 = vmatprep.mubr.bf16.mxu0 0
        %456 = vmatmul.mubr.bf16.gmra.mrb[0].mxu0 %v389
        %v457 = vpop.f32.mrb[0].mxu0
        %v458 = vadd.f32 %v327, %v457
        %v459 = vpop.f32.mrb[0].mxu0
        %v460 = vpop.f32.mrb[0].mxu0
        %v461 = vadd.f32 %v332, %v460
        %v462 = vpop.f32.mrb[0].mxu0
        %463 = vdwg.mxu0
        %vm464 = vcmp.gt.f32.partialorder %v450, 0.0
        %vm465 = vcmp.gt.f32.partialorder %v453, 0.0
        %vm466 = vcmp.gt.f32.partialorder %v458, 0.0
        %vm467 = vcmp.gt.f32.partialorder %v461, 0.0
        %v468 = vmul.f32 %v450, 0.2
        %v469 = vmul.f32 %v453, 0.2
        %v470 = vmul.f32 %v458, 0.2
        %v471 = vmul.f32 %v461, 0.2
        %v472 = vsel %vm464, %v450, %v468
        %v473 = vsel %vm465, %v453, %v469
        %v474 = vsel %vm466, %v458, %v470
        %v475 = vsel %vm467, %v461, %v471
        %v476 = vld [vmem:[%s3] sm:$0x3]
        %v477 = vld [vmem:[%s4] sm:$0x3]
        %479 = vset.pattern.permute.xlu0 0
        %480 = vperm.xlu0 %479, %v477
        %v481 = vpop.permute.xlu0 %480
        %v484 = vsel %vm384, %v476, 0
        %486 = vmatprep.subr.mxu0 0.0
        %487 = vmatpush1.msra.mxu0 %v472
        %488 = vmatprep.subr.mxu0 0.0
        %489 = vmatpush1.msra.mxu0 %v473
        %490 = vmatprep.subr.mxu0 0.0
        %491 = vmatpush1.msra.mxu0 %v474
        %492 = vmatprep.subr.mxu0 0.0
        %493 = vmatpush1.msra.mxu0 %v475
        %494 = vmatprep.subr.mxu0 0.0
        %495 = vmatpush1.msra.mxu0 0.0
        %496 = vmatprep.subr.mxu0 0.0
        %497 = vmatpush1.msra.mxu0 0.0
        %498 = vmatprep.subr.mxu0 0.0
        %499 = vmatpush1.msra.mxu0 0.0
        %500 = vmatprep.subr.mxu0 0.0
        %501 = vmatpush1.msra.mxu0 0.0
        %502 = vmatprep.subr.mxu0 0.0
        %503 = vmatpush1.msra.mxu0 0.0
        %504 = vmatprep.subr.mxu0 0.0
        %505 = vmatpush1.msra.mxu0 0.0
        %506 = vmatprep.subr.mxu0 0.0
        %507 = vmatpush1.msra.mxu0 0.0
        %508 = vmatprep.subr.mxu0 0.0
        %509 = vmatpush1.msra.mxu0 0.0
        %510 = vmatprep.subr.mxu0 0.0
        %511 = vmatpush1.msra.mxu0 0.0
        %512 = vmatprep.subr.mxu0 0.0
        %513 = vmatpush1.msra.mxu0 0.0
        %514 = vmatprep.subr.mxu0 0.0
        %515 = vmatpush1.msra.mxu0 0.0
        %516 = vmatprep.subr.mxu0 0.0
        %517 = vmatpush1.msra.mxu0 0.0
        %518 = vmatprep.subr.mxu0 0.0
        %519 = vmatpush1.msra.mxu0 0.0
        %520 = vmatprep.subr.mxu0 0.0
        %521 = vmatpush1.msra.mxu0 0.0
        %522 = vmatprep.subr.mxu0 0.0
        %523 = vmatpush1.msra.mxu0 0.0
        %524 = vmatprep.subr.mxu0 0.0
        %525 = vmatpush1.msra.mxu0 0.0
        %526 = vmatprep.subr.mxu0 0.0
        %527 = vmatpush1.msra.mxu0 0.0
        %528 = vmatprep.subr.mxu0 0.0
        %529 = vmatpush1.msra.mxu0 0.0
        %530 = vmatprep.subr.mxu0 0.0
        %531 = vmatpush1.msra.mxu0 0.0
        %532 = vmatprep.subr.mxu0 0.0
        %533 = vmatpush1.msra.mxu0 0.0
        %534 = vmatprep.subr.mxu0 0.0
        %535 = vmatpush1.msra.mxu0 0.0
        %536 = vmatprep.subr.mxu0 0.0
        %537 = vmatpush1.msra.mxu0 0.0
        %538 = vmatprep.subr.mxu0 0.0
        %539 = vmatpush1.msra.mxu0 0.0
        %540 = vmatprep.subr.mxu0 0.0
        %541 = vmatpush1.msra.mxu0 0.0
        %542 = vmatprep.subr.mxu0 0.0
        %543 = vmatpush1.msra.mxu0 0.0
        %544 = vmatprep.subr.mxu0 0.0
        %545 = vmatpush1.msra.mxu0 0.0
        %546 = vmatprep.subr.mxu0 0.0
        %547 = vmatpush1.msra.mxu0 0.0
        %548 = vmatprep.subr.mxu0 0.0
        %549 = vmatpush1.msra.mxu0 0.0
        %550 = vmatprep.mubr.f32.mxu0 0.0
        %551 = vmatmul.mubr.f32.gmra.mrb[0].mxu0 %v484
        %v552 = vpop.f32.mrb[0].mxu0
        %v553 = vadd.f32 %v481, %v552
        %v554 = vpop.f32.mrb[0].mxu0
        %555 = vdwg.mxu0
        %vm556 = vcmask 1041408
        %v557 = vsel %vm556, %v553, -inf
        %v558 = vrot.slane %v557, 4
        %v559 = vmax.f32 %v557, %v558
        %v560 = vrot.slane %v559, 2
        %v561 = vmax.f32 %v559, %v560
        %v562 = vrot.slane %v561, 1
        %v563 = vmax.f32 %v561, %v562
        %v564 = vsub.f32 %v553, %v563
        %v565 = vmul.f32 %v564, 1.442695
        %v566 = vpow.pop %v565
        %v567 = vsel %vm556, %v566, 0.0
        %v568 = vrot.slane %v567, 4
        %v569 = vadd.f32 %v567, %v568
        %v570 = vrot.slane %v569, 2
        %v571 = vadd.f32 %v569, %v570
        %v572 = vrot.slane %v571, 1
        %v573 = vadd.f32 %v571, %v572
        %v574 = vrcp.pop %v573
        %v575 = vmul.f32 %v566, %v574
        %v576 = vld [vmem:[%s288] sm:$0xf]
        %v577 = vunpack.c.l.bf16 %v576
        %v578 = vlaneseq
        %v579 = vshrl.u32 %v578, 7
        %v580 = vsub.s32 0, %v579
        %v581 = vrot.slane %v575, %v580
        %v582 = vmul.f32 %v581, %v577
        %v583 = vlaneseq
        %v584 = vshrl.u32 %v583, 7
        %v585 = vsub.s32 1, %v584
        %v586 = vrot.slane %v575, %v585
        %v587 = vmul.f32 %v586, %v577
        %v589 = vrot.slane %v587, 4
        %v591 = vadd.f32 %v582, %v589
        %592 = vst [vmem:[%s270] sm:$0xf] %v591
        %s593 = sand.u32 %s164, 1
        %s594 = scalar_lea.sflag [#allocation3], %s593
        %s595 = sand.u32 %s164, 1
        %s596 = smul.addr %s595, 4
        %s597 = scalar_lea.vmem [#allocation2], %s596
        // Predicated region
        $region45: #{tpu_custom_call.1} parent=43 // pred_check
          %p598 = pneg %p174
        $region46: #{tpu_custom_call.1} parent=43 // pred_check_branch
          %600 = sbr.rel (%p598) target = $region48
        $region47: #{tpu_custom_call.1} parent=43 // pred_region
          %s602 = ssub.s32 64, 64
          %603 = vsyncadd %s594, %s602
          %s604 = smul.addr %s20, 64
          %s605 = scalar_lea.hbm %s6, %s604
          %s607 = sshll.u32 %s597, 4
          %s608 = int_to_ptr.vmem [resolvable:$true] %s607
          %610 = dma.vmem_to_hbm [thread:$0]  %s608, 64, %s605, %s594
        $region48: #{tpu_custom_call.1} parent=43 // pred_fallthru
          _
      $region44: #{tpu_custom_call.1} parent=5 // pred_fallthru
        _
      %p611 = scmp.le.s32.totalorder 2, %s15
      // Predicated region
      $region49: #{tpu_custom_call.1} parent=5 // pred_check
        %p612 = pneg %p611
      $region50: #{tpu_custom_call.1} parent=5 // pred_check_branch
        %614 = sbr.rel (%p612) target = $region52
      $region51: #{tpu_custom_call.1} parent=5 // pred_region
        %s615 = ssub.s32 %s15, 2
        // Predicated region
        $region53: #{tpu_custom_call.1} parent=51 // pred_check
          %p616 = pneg %p180
        $region54: #{tpu_custom_call.1} parent=51 // pred_check_branch
          %618 = sbr.rel (%p616) target = $region56
        $region55: #{tpu_custom_call.1} parent=51 // pred_region
          %s619 = sand.u32 %s165, 1
          %s620 = scalar_lea.sflag [#allocation3], %s619
          %s621 = sand.u32 %s165, 1
          %s622 = smul.addr %s621, 4
          %s623 = scalar_lea.vmem [#allocation2], %s622
          %624 = dma.done %s620, 64
        $region56: #{tpu_custom_call.1} parent=51 // pred_fallthru
          _
      $region52: #{tpu_custom_call.1} parent=5 // pred_fallthru
        _
    $region6: #{tpu_custom_call.1} parent=1 // loop_footer
      %s19 = sadd.s32 1, %s15
    $region7: #{tpu_custom_call.1} parent=1 // loop_footer_branch
      %14 = sbr.rel target = $region3
    $region8: #{tpu_custom_call.1} parent=1 // loop_exit
      _
    %625 = vsyncpa [#allocation3], 1
    %s626 = scalar_lea.sflag [#allocation3], 1
    %627 = vsyncpa %s626, 1

</llo_original>
